<compile_context>
chip_gen: v6e
topology: v6e:2x2x1
jax: 0.10.0
libtpu: 0.0.40
codegen_flags: <defaults>
</compile_context>

<pallas_src>
import math

import jax
import jax.numpy as jnp
from jax.experimental import pallas as pl
from jax.experimental.pallas import tpu as pltpu

OBS_SIZE = 24        # BipedalWalker-v3 observation size
HIDDEN = 256
MAX_TB = 2048        # max batch-tile rows per grid step


def _value_kernel(x_ref, w1_ref, b1_ref, w2_ref, b2_ref, out_ref):
    # fc1 + ReLU: bf16 MXU matmul with f32 accumulate; elementwise stays f32.
    x = x_ref[...].astype(jnp.bfloat16)
    h = jnp.dot(x, w1_ref[...], preferred_element_type=jnp.float32)
    h = jnp.maximum(h + b1_ref[...], 0.0)
    # fc2 -> single real value column [TB, 1].
    v = jnp.dot(h.astype(jnp.bfloat16), w2_ref[...],
                preferred_element_type=jnp.float32)
    out_ref[...] = (v + b2_ref[...]).astype(out_ref.dtype)


def prepare_params(w1, b1, w2, b2):
    """One-time layout prep: bf16 weights, 2-D f32 biases."""
    w1p = w1.astype(jnp.bfloat16)                       # [obs, 256]
    b1p = b1.reshape(1, HIDDEN).astype(jnp.float32)     # [1, 256]
    w2p = w2.reshape(HIDDEN, 1).astype(jnp.bfloat16)    # [256, 1]
    b2p = b2.reshape(1, 1).astype(jnp.float32)          # [1, 1]
    return w1p, b1p, w2p, b2p


def _cdiv(a, b):
    return (a + b - 1) // b


def _round_up(n, m):
    return _cdiv(n, m) * m


def _next_pow2(n):
    return 1 << (max(int(n), 1) - 1).bit_length()


@jax.jit
def _value_forward_padded(x, params):
    """x: [Bq, OBS_SIZE] f32 (Bq already bucketed). Returns [Bq, 1] f32."""
    w1p, b1p, w2p, b2p = params
    bq = x.shape[0]

    # Balanced tiles, at least 2 (even) grid steps for v7x megacore sharding.
    steps = max(2, _cdiv(bq, MAX_TB))
    if steps % 2:
        steps += 1
    tb = _round_up(_cdiv(bq, steps), 8)   # sublane-aligned batch tile
    bp = steps * tb
    if bp != bq:
        x = jnp.pad(x, ((0, bp - bq), (0, 0)))

    out = pl.pallas_call(
        _value_kernel,
        out_shape=jax.ShapeDtypeStruct((bp, 1), jnp.float32),
        grid=(steps,),
        in_specs=[
            pl.BlockSpec((tb, OBS_SIZE), lambda i: (i, 0)),      # x   (streams)
            pl.BlockSpec((OBS_SIZE, HIDDEN), lambda i: (0, 0)),  # w1  (resident)
            pl.BlockSpec((1, HIDDEN), lambda i: (0, 0)),         # b1
            pl.BlockSpec((HIDDEN, 1), lambda i: (0, 0)),         # w2
            pl.BlockSpec((1, 1), lambda i: (0, 0)),              # b2
        ],
        out_specs=pl.BlockSpec((tb, 1), lambda i: (i, 0)),
        compiler_params=pltpu.CompilerParams(
            dimension_semantics=("parallel",),       # batch split across TCs
            vmem_limit_bytes=16 * 1024 * 1024,       # headroom for TB=2048
        ),
    )(x, w1p, b1p, w2p, b2p)

    # Padded rows carry garbage (ReLU(b1)·w2 + b2); never expose them.
    return out[:bq]


def value_forward(x, params):
    """x: [B, OBS_SIZE] f32.  Returns value estimates [B, 1] f32."""
    B = x.shape[0]
    # Bucket B so jit only compiles a handful of shapes across a PPO run.
    bq = max(16, _next_pow2(B))
    if bq != B:
        x = jnp.pad(x, ((0, bq - B), (0, 0)))
    out = _value_forward_padded(x, params)
    return out[:B]


def init_params(key):
    """Deterministic params matching nn.Linear default init U[-1/sqrt(fan_in), ..]."""
    k1, k2, k3, k4 = jax.random.split(key, 4)
    lim1 = 1.0 / math.sqrt(OBS_SIZE)
    lim2 = 1.0 / math.sqrt(HIDDEN)
    w1 = jax.random.uniform(k1, (OBS_SIZE, HIDDEN), jnp.float32, -lim1, lim1)
    b1 = jax.random.uniform(k2, (HIDDEN,), jnp.float32, -lim1, lim1)
    w2 = jax.random.uniform(k3, (HIDDEN, 1), jnp.float32, -lim2, lim2)
    b2 = jax.random.uniform(k4, (1,), jnp.float32, -lim2, lim2)
    return w1, b1, w2, b2


if __name__ == "__main__":
    key = jax.random.PRNGKey(0)
    kx, kp = jax.random.split(key)
    batch = 8
    x = jax.random.normal(kx, (batch, OBS_SIZE), jnp.float32)
    w1, b1, w2, b2 = init_params(kp)
    params = prepare_params(w1, b1, w2, b2)

    value = value_forward(x, params)
    jax.block_until_ready(value)
    assert value.shape == (batch, 1)

    # Reference 1: pure-JAX replica of the kernel's bf16-weight/f32-acc math.
    xb = x.astype(jnp.bfloat16)
    h_ref = jnp.maximum(
        jnp.dot(xb, w1.astype(jnp.bfloat16),
                preferred_element_type=jnp.float32) + b1, 0.0)
    v_ref = jnp.dot(h_ref.astype(jnp.bfloat16), w2.astype(jnp.bfloat16),
                    preferred_element_type=jnp.float32) + b2
    assert jnp.allclose(value, v_ref, atol=1e-3, rtol=1e-3), (
        float(jnp.max(jnp.abs(value - v_ref))))

    # Reference 2: true f32 reference (PyTorch semantics); loose tolerance
    # justified by the in-kernel bf16 quantization of x, weights and h.
    h32 = jnp.maximum(jnp.dot(x, w1) + b1, 0.0)
    v32 = jnp.dot(h32, w2) + b2
    assert jnp.allclose(value, v32, atol=5e-2, rtol=5e-2), (
        float(jnp.max(jnp.abs(value - v32))))

    print("KERNEL_OK")
</pallas_src>

<mosaic_0001>
module attributes {stable_mosaic.version = 11 : i64} {
  func.func @_value_kernel(%arg0: i32, %arg1: memref<8x24xf32, #tpu.memory_space<vmem>>, %arg2: memref<24x256xbf16, #tpu.memory_space<vmem>>, %arg3: memref<1x256xf32, #tpu.memory_space<vmem>>, %arg4: memref<256x1xbf16, #tpu.memory_space<vmem>>, %arg5: memref<1x1xf32, #tpu.memory_space<vmem>>, %arg6: memref<8x1xf32, #tpu.memory_space<vmem>>) attributes {dimension_semantics = [#tpu.dimension_semantics<parallel>], iteration_bounds = array<i64: 2>, scalar_prefetch = 0 : i64, scratch_operands = 0 : i64, tpu.core_type = #tpu.core_type<tc>, window_params = [{transform_indices = @transform_0, window_bounds = array<i64: 8, 24>}, {pipeline_mode = #tpu.pipeline_mode<synchronous>, transform_indices = @transform_1, window_bounds = array<i64: 24, 256>}, {pipeline_mode = #tpu.pipeline_mode<synchronous>, transform_indices = @transform_2, window_bounds = array<i64: 1, 256>}, {pipeline_mode = #tpu.pipeline_mode<synchronous>, transform_indices = @transform_3, window_bounds = array<i64: 256, 1>}, {pipeline_mode = #tpu.pipeline_mode<synchronous>, transform_indices = @transform_4, window_bounds = array<i64: 1, 1>}, {transform_indices = @transform_5, window_bounds = array<i64: 8, 1>}]} {
    %c0 = arith.constant 0 : index
    %c0_0 = arith.constant 0 : index
    %0 = vector.load %arg1[%c0, %c0_0] : memref<8x24xf32, #tpu.memory_space<vmem>>, vector<8x24xf32>
    %1 = arith.truncf %0 : vector<8x24xf32> to vector<8x24xbf16>
    %c0_1 = arith.constant 0 : index
    %c0_2 = arith.constant 0 : index
    %2 = vector.load %arg2[%c0_1, %c0_2] : memref<24x256xbf16, #tpu.memory_space<vmem>>, vector<24x256xbf16>
    %cst = arith.constant dense<0.000000e+00> : vector<8x256xf32>
    %3 = tpu.matmul %1, %2, %cst {dimension_numbers = #tpu.dot_dimension_numbers<[1], [0], [0], [1], [0, 0, 1, 1], [], []>} : vector<8x24xbf16>, vector<24x256xbf16>, vector<8x256xf32> -> vector<8x256xf32>
    %c0_3 = arith.constant 0 : index
    %c0_4 = arith.constant 0 : index
    %4 = vector.load %arg3[%c0_3, %c0_4] : memref<1x256xf32, #tpu.memory_space<vmem>>, vector<1x256xf32>
    %5 = vector.broadcast %4 : vector<1x256xf32> to vector<8x256xf32>
    %6 = arith.addf %3, %5 : vector<8x256xf32>
    %cst_5 = arith.constant 0.000000e+00 : f32
    %7 = vector.broadcast %cst_5 : f32 to vector<8x256xf32>
    %8 = arith.maximumf %6, %7 : vector<8x256xf32>
    %9 = arith.truncf %8 : vector<8x256xf32> to vector<8x256xbf16>
    %c0_6 = arith.constant 0 : index
    %c0_7 = arith.constant 0 : index
    %10 = vector.load %arg4[%c0_6, %c0_7] : memref<256x1xbf16, #tpu.memory_space<vmem>>, vector<256x1xbf16>
    %cst_8 = arith.constant dense<0.000000e+00> : vector<8x1xf32>
    %11 = tpu.matmul %9, %10, %cst_8 {dimension_numbers = #tpu.dot_dimension_numbers<[1], [0], [0], [1], [0, 0, 1, 1], [], []>} : vector<8x256xbf16>, vector<256x1xbf16>, vector<8x1xf32> -> vector<8x1xf32>
    %c0_9 = arith.constant 0 : index
    %c0_10 = arith.constant 0 : index
    %12 = vector.load %arg5[%c0_9, %c0_10] : memref<1x1xf32, #tpu.memory_space<vmem>>, vector<1x1xf32>
    %13 = vector.broadcast %12 : vector<1x1xf32> to vector<8x1xf32>
    %14 = arith.addf %11, %13 : vector<8x1xf32>
    %c0_11 = arith.constant 0 : index
    %c0_12 = arith.constant 0 : index
    %15 = vector.load %arg6[%c0_11, %c0_12] : memref<8x1xf32, #tpu.memory_space<vmem>>, vector<8x1xf32>
    tpu.vector_store %arg6[%c0_11, %c0_12], %14 {strides = array<i32>} : memref<8x1xf32, #tpu.memory_space<vmem>>, vector<8x1xf32>,
    return
  }
  func.func @transform_0(%arg0: i32) -> (i32, i32) {
    %c0_i32 = arith.constant 0 : i32
    %c0_i32_0 = arith.constant 0 : i32
    return %arg0, %c0_i32 : i32, i32
  }
  func.func @transform_1(%arg0: i32) -> (i32, i32) {
    %c0_i32 = arith.constant 0 : i32
    %c0_i32_0 = arith.constant 0 : i32
    %c0_i32_1 = arith.constant 0 : i32
    return %c0_i32, %c0_i32_0 : i32, i32
  }
  func.func @transform_2(%arg0: i32) -> (i32, i32) {
    %c0_i32 = arith.constant 0 : i32
    %c0_i32_0 = arith.constant 0 : i32
    %c0_i32_1 = arith.constant 0 : i32
    return %c0_i32, %c0_i32_0 : i32, i32
  }
  func.func @transform_3(%arg0: i32) -> (i32, i32) {
    %c0_i32 = arith.constant 0 : i32
    %c0_i32_0 = arith.constant 0 : i32
    %c0_i32_1 = arith.constant 0 : i32
    return %c0_i32, %c0_i32_0 : i32, i32
  }
  func.func @transform_4(%arg0: i32) -> (i32, i32) {
    %c0_i32 = arith.constant 0 : i32
    %c0_i32_0 = arith.constant 0 : i32
    %c0_i32_1 = arith.constant 0 : i32
    return %c0_i32, %c0_i32_0 : i32, i32
  }
  func.func @transform_5(%arg0: i32) -> (i32, i32) {
    %c0_i32 = arith.constant 0 : i32
    %c0_i32_0 = arith.constant 0 : i32
    return %arg0, %c0_i32 : i32, i32
  }
}

</mosaic_0001>

<llo_original>
// kernel: _value_forward_padded.1
$region0: #{_value_forward_padded.1}
  #allocation0 [shape = 'u32[]', space=smem, size = 0x4, offset = 0x4, fixed_abs, tag = 'smem constant byte address 0x4 - core index']
  #allocation1 [shape = 'u32[144,128]{1,0:T(1,128)}', space=vmem, size = 0x12000, scoped, tag = 'internal scratch']
  #allocation2 [shape = 'f32[1,1]{1,0:T(1,128)S(1)}', space=vmem, size = 0x200, scoped, tag = 'scoped memory for _value_forward_padded.1']
  %s0 = inlined_call_operand.vmem [shape: f32[16,24], index: 0, kind: input, shape index: {}]
  %s1 = inlined_call_operand.vmem [shape: bf16[24,256], index: 1, kind: input, shape index: {}]
  %s2 = inlined_call_operand.vmem [shape: f32[1,256], index: 2, kind: input, shape index: {}]
  %s3 = inlined_call_operand.vmem [shape: bf16[256,1], index: 3, kind: input, shape index: {}]
  %s4 = inlined_call_operand.<no memory space> [shape: f32[1,1], index: 4, kind: input, shape index: {}]
  %s5 = inlined_call_operand.vmem [shape: f32[16,1], index: 5, kind: output, shape index: {}]
  %s6 = sld [smem:[#allocation0]]
  $region53: #{_value_forward_padded.1} parent=0
    _
  %s8 = ssub.s32 1, %s6
  %s9 = scalar_select 0, %s8, %s6
  %v10 = vstv %s4
  %11 = vst [vmem:[#allocation2] sm:$0x1] %v10
  loop: start=0, step=1, limit=4
  $region2: #{_value_forward_padded.1} parent=0 // loop_pre_header
    _
  $region3: #{_value_forward_padded.1} parent=0 // loop_header
    %s13 = sphi 0, %s17
    %p14 = scmp.ge.s32.totalorder %s13, 4
    %s23 = sphi 0, %s25
    %s26 = sphi 0, %s23
    %s27 = sphi 0, %s26
    %s43 = sphi 0, %s27
    %s47 = sphi 0, %s47
    %s49 = sphi 0, %s47
    %s50 = sphi 0, %s49
    %s64 = sphi 0, %s50
    %s68 = sphi 0, %s68
    %s70 = sphi 0, %s68
    %s71 = sphi 0, %s70
    %s85 = sphi 0, %s71
    %s89 = sphi 0, %s89
    %s91 = sphi 0, %s89
    %s92 = sphi 0, %s91
    %s106 = sphi 0, %s92
    %s110 = sphi 0, %s110
    %s112 = sphi 0, %s110
    %s113 = sphi 0, %s112
    %s127 = sphi 0, %s113
    %s133 = sphi 0, %s135
    %s136 = sphi 0, %s133
    %s137 = sphi 0, %s136
    %s153 = sphi 0, %s137
  $region4: #{_value_forward_padded.1} parent=0 // loop_header_branch
    %16 = sbr.rel (%p14) target = $region8
  $region5: #{_value_forward_padded.1} parent=0 // loop_body
    %s18 = ssub.s32 %s13, 1
    %s19 = ssub.s32 %s13, 2
    %s20 = sadd.s32 %s13, 1
    %s21 = ssub.s32 %s13, %s20
    %p22 = scmp.eq.s32.totalorder %s21, 0
    %s24 = sadd.s32 %s23, 1
    %s25 = scalar_select %p22, %s23, %s24
    %p28 = pneg %p22
    %p29 = scmp.eq.s32.totalorder %s13, 1
    %p30 = por %p28, %p29
    %p31 = scmp.ne.s32.totalorder %s23, %s26
    %p32 = scmp.eq.s32.totalorder %s13, 0
    %p33 = por %p31, %p32
    %p34 = scmp.ne.s32.totalorder %s23, %s26
    %p35 = scmp.eq.s32.totalorder %s18, 1
    %p36 = por %p34, %p35
    %p37 = scmp.ne.s32.totalorder %s26, %s27
    %p38 = scmp.eq.s32.totalorder %s18, 0
    %p39 = por %p37, %p38
    %p40 = scmp.ne.s32.totalorder %s26, %s27
    %p41 = scmp.eq.s32.totalorder %s19, 1
    %p42 = por %p40, %p41
    %p44 = scmp.ne.s32.totalorder %s27, %s43
    %p45 = scmp.eq.s32.totalorder %s19, 0
    %p46 = por %p44, %p45
    %s48 = sadd.s32 %s47, 1
    %p51 = scmp.eq.s32.totalorder %s13, 1
    %p52 = scmp.ne.s32.totalorder %s47, %s49
    %p53 = scmp.eq.s32.totalorder %s13, 0
    %p54 = por %p52, %p53
    %p55 = scmp.ne.s32.totalorder %s47, %s49
    %p56 = scmp.eq.s32.totalorder %s18, 1
    %p57 = por %p55, %p56
    %p58 = scmp.ne.s32.totalorder %s49, %s50
    %p59 = scmp.eq.s32.totalorder %s18, 0
    %p60 = por %p58, %p59
    %p61 = scmp.ne.s32.totalorder %s49, %s50
    %p62 = scmp.eq.s32.totalorder %s19, 1
    %p63 = por %p61, %p62
    %p65 = scmp.ne.s32.totalorder %s50, %s64
    %p66 = scmp.eq.s32.totalorder %s19, 0
    %p67 = por %p65, %p66
    %s69 = sadd.s32 %s68, 1
    %p72 = scmp.eq.s32.totalorder %s13, 1
    %p73 = scmp.ne.s32.totalorder %s68, %s70
    %p74 = scmp.eq.s32.totalorder %s13, 0
    %p75 = por %p73, %p74
    %p76 = scmp.ne.s32.totalorder %s68, %s70
    %p77 = scmp.eq.s32.totalorder %s18, 1
    %p78 = por %p76, %p77
    %p79 = scmp.ne.s32.totalorder %s70, %s71
    %p80 = scmp.eq.s32.totalorder %s18, 0
    %p81 = por %p79, %p80
    %p82 = scmp.ne.s32.totalorder %s70, %s71
    %p83 = scmp.eq.s32.totalorder %s19, 1
    %p84 = por %p82, %p83
    %p86 = scmp.ne.s32.totalorder %s71, %s85
    %p87 = scmp.eq.s32.totalorder %s19, 0
    %p88 = por %p86, %p87
    %s90 = sadd.s32 %s89, 1
    %p93 = scmp.eq.s32.totalorder %s13, 1
    %p94 = scmp.ne.s32.totalorder %s89, %s91
    %p95 = scmp.eq.s32.totalorder %s13, 0
    %p96 = por %p94, %p95
    %p97 = scmp.ne.s32.totalorder %s89, %s91
    %p98 = scmp.eq.s32.totalorder %s18, 1
    %p99 = por %p97, %p98
    %p100 = scmp.ne.s32.totalorder %s91, %s92
    %p101 = scmp.eq.s32.totalorder %s18, 0
    %p102 = por %p100, %p101
    %p103 = scmp.ne.s32.totalorder %s91, %s92
    %p104 = scmp.eq.s32.totalorder %s19, 1
    %p105 = por %p103, %p104
    %p107 = scmp.ne.s32.totalorder %s92, %s106
    %p108 = scmp.eq.s32.totalorder %s19, 0
    %p109 = por %p107, %p108
    %s111 = sadd.s32 %s110, 1
    %p114 = scmp.eq.s32.totalorder %s13, 1
    %p115 = scmp.ne.s32.totalorder %s110, %s112
    %p116 = scmp.eq.s32.totalorder %s13, 0
    %p117 = por %p115, %p116
    %p118 = scmp.ne.s32.totalorder %s110, %s112
    %p119 = scmp.eq.s32.totalorder %s18, 1
    %p120 = por %p118, %p119
    %p121 = scmp.ne.s32.totalorder %s112, %s113
    %p122 = scmp.eq.s32.totalorder %s18, 0
    %p123 = por %p121, %p122
    %p124 = scmp.ne.s32.totalorder %s112, %s113
    %p125 = scmp.eq.s32.totalorder %s19, 1
    %p126 = por %p124, %p125
    %p128 = scmp.ne.s32.totalorder %s113, %s127
    %p129 = scmp.eq.s32.totalorder %s19, 0
    %p130 = por %p128, %p129
    %s131 = ssub.s32 %s13, %s20
    %p132 = scmp.eq.s32.totalorder %s131, 0
    %s134 = sadd.s32 %s133, 1
    %s135 = scalar_select %p132, %s133, %s134
    %p138 = pneg %p132
    %p139 = scmp.eq.s32.totalorder %s13, 1
    %p140 = por %p138, %p139
    %p141 = scmp.ne.s32.totalorder %s133, %s136
    %p142 = scmp.eq.s32.totalorder %s13, 0
    %p143 = por %p141, %p142
    %p144 = scmp.ne.s32.totalorder %s133, %s136
    %p145 = scmp.eq.s32.totalorder %s18, 1
    %p146 = por %p144, %p145
    %p147 = scmp.ne.s32.totalorder %s136, %s137
    %p148 = scmp.eq.s32.totalorder %s18, 0
    %p149 = por %p147, %p148
    %p150 = scmp.ne.s32.totalorder %s136, %s137
    %p151 = scmp.eq.s32.totalorder %s19, 1
    %p152 = por %p150, %p151
    %p154 = scmp.ne.s32.totalorder %s137, %s153
    %p155 = scmp.eq.s32.totalorder %s19, 0
    %p156 = por %p154, %p155
    %p157 = scmp.le.s32.totalorder 1, %s13
    %p158 = scmp.lt.s32.totalorder %s13, 3
    %p159 = pnand %p157, %p158
    %p160 = pneg %p159
    // Predicated region
    $region9: #{_value_forward_padded.1} parent=5 // pred_check
      _
    $region10: #{_value_forward_padded.1} parent=5 // pred_check_branch
      %162 = sbr.rel (%p159) target = $region12
    $region11: #{_value_forward_padded.1} parent=5 // pred_region
      %s163 = ssub.s32 %s13, 1
      // Predicated region
      $region13: #{_value_forward_padded.1} parent=11 // pred_check
        %p164 = pneg %p60
      $region14: #{_value_forward_padded.1} parent=11 // pred_check_branch
        %166 = sbr.rel (%p164) target = $region16
      $region15: #{_value_forward_padded.1} parent=11 // pred_region
        _
      $region16: #{_value_forward_padded.1} parent=11 // pred_fallthru
        _
      // Predicated region
      $region17: #{_value_forward_padded.1} parent=11 // pred_check
        %p167 = pneg %p81
      $region18: #{_value_forward_padded.1} parent=11 // pred_check_branch
        %169 = sbr.rel (%p167) target = $region20
      $region19: #{_value_forward_padded.1} parent=11 // pred_region
        _
      $region20: #{_value_forward_padded.1} parent=11 // pred_fallthru
        _
      // Predicated region
      $region21: #{_value_forward_padded.1} parent=11 // pred_check
        %p170 = pneg %p102
      $region22: #{_value_forward_padded.1} parent=11 // pred_check_branch
        %172 = sbr.rel (%p170) target = $region24
      $region23: #{_value_forward_padded.1} parent=11 // pred_region
        _
      $region24: #{_value_forward_padded.1} parent=11 // pred_fallthru
        _
      // Predicated region
      $region25: #{_value_forward_padded.1} parent=11 // pred_check
        %p173 = pneg %p123
      $region26: #{_value_forward_padded.1} parent=11 // pred_check_branch
        %175 = sbr.rel (%p173) target = $region28
      $region27: #{_value_forward_padded.1} parent=11 // pred_region
        _
      $region28: #{_value_forward_padded.1} parent=11 // pred_fallthru
        _
    $region12: #{_value_forward_padded.1} parent=5 // pred_fallthru
      _
    %p176 = scmp.lt.s32.totalorder %s13, 2
    // Predicated region
    $region29: #{_value_forward_padded.1} parent=5 // pred_check
      %p177 = pneg %p176
    $region30: #{_value_forward_padded.1} parent=5 // pred_check_branch
      %179 = sbr.rel (%p177) target = $region32
    $region31: #{_value_forward_padded.1} parent=5 // pred_region
      // Predicated region
      $region33: #{_value_forward_padded.1} parent=31 // pred_check
        %p180 = pneg %p33
      $region34: #{_value_forward_padded.1} parent=31 // pred_check_branch
        %182 = sbr.rel (%p180) target = $region36
      $region35: #{_value_forward_padded.1} parent=31 // pred_region
        %p183 = scmp.lt.s32.totalorder %s13, 1
        %s184 = scalar_select %p183, %s13, 1
        %s185 = smul.addr %s184, 8
        %s186 = scalar_lea.vmem %s0, %s185
      $region36: #{_value_forward_padded.1} parent=31 // pred_fallthru
        _
    $region32: #{_value_forward_padded.1} parent=5 // pred_fallthru
      _
    %p187 = scmp.le.s32.totalorder 1, %s13
    %p188 = scmp.lt.s32.totalorder %s13, 3
    %p189 = pnand %p187, %p188
    %p190 = pneg %p189
    // Predicated region
    $region37: #{_value_forward_padded.1} parent=5 // pred_check
      _
    $region38: #{_value_forward_padded.1} parent=5 // pred_check_branch
      %192 = sbr.rel (%p189) target = $region40
    $region39: #{_value_forward_padded.1} parent=5 // pred_region
      %s193 = ssub.s32 %s13, 1
      %p194 = scmp.lt.s32.totalorder %s18, 1
      %s195 = scalar_select %p194, %s18, 1
      %s196 = smul.addr %s195, 8
      %s197 = scalar_lea.vmem %s0, %s196
      %p198 = pneg %p39
      %p199 = pneg %p36
      %p200 = pneg %p60
      %p201 = pneg %p57
      %p202 = pneg %p81
      %p203 = pneg %p78
      %p204 = pneg %p102
      %p205 = pneg %p99
      %p206 = pneg %p123
      %p207 = pneg %p120
      %p208 = pneg %p149
      %p209 = pneg %p146
      %p210 = scmp.lt.s32.totalorder %s18, 1
      %s211 = scalar_select %p210, %s18, 1
      %s212 = smul.addr %s211, 8
      %s213 = scalar_lea.vmem %s5, %s212
      %p214 = scmp.lt.s32.totalorder %s18, 1
      %s215 = scalar_select %p214, %s18, 1
      %s216 = smul.addr %s215, 8
      %s217 = scalar_lea.vmem %s0, %s216
      %p218 = scmp.lt.s32.totalorder %s18, 1
      %s219 = scalar_select %p218, %s18, 1
      %s220 = smul.addr %s219, 8
      %s221 = scalar_lea.vmem %s5, %s220
      %v223 = vld [vmem:[%s217] sm:$0xff]
      %v224 = vpack.c.bf16 %v223, %v223
      %v225 = vld [vmem:[%s1] sm:$0xff]
      %v226 = vld [vmem:[%s1 + $0x8] sm:$0xff]
      %v227 = vld [vmem:[%s1 + $0x10] sm:$0xff]
      %v228 = vld [vmem:[%s2] sm:$0x3]
      %v230 = vlaneseq
      %v231 = vshrl.u32 %v230, 7
      %v232 = vsub.s32 0, %v231
      %v233 = vrot.slane %v228, %v232
      %v234 = vlaneseq
      %v235 = vshrl.u32 %v234, 7
      %v236 = vsub.s32 1, %v235
      %v237 = vrot.slane %v228, %v236
      %v243 = vunpack.c.l.b16 %v225
      %v244 = vunpack.c.h.b16 %v225
      %v245 = vunpack.c.l.b16 %v226
      %v246 = vunpack.c.h.b16 %v226
      %v247 = vunpack.c.l.b16 %v227
      %v248 = vunpack.c.h.b16 %v227
      %v249 = vpack.c.b16 %v245, %v243
      %v250 = vpack.c.b16 %v246, %v244
      %v251 = vpack.c.b16 %v247, %v247
      %v252 = vpack.c.b16 %v248, %v248
      %vm255 = vcmask 195584
      %v257 = vsel %vm255, %v224, 0
      %vm259 = vcmask 1043456
      %v261 = vsel %vm259, %v251, 0
      %v264 = vsel %vm259, %v252, 0
      %266 = vmatprep.subr.bf16.mxu0 0
      %267 = vmatpush1.bf16.msra.mxu0 0
      %268 = vmatprep.subr.bf16.mxu0 0
      %269 = vmatpush1.bf16.msra.mxu0 0
      %270 = vmatprep.subr.bf16.mxu0 0
      %271 = vmatpush1.bf16.msra.mxu0 0
      %272 = vmatprep.subr.bf16.mxu0 0
      %273 = vmatpush1.bf16.msra.mxu0 0
      %274 = vmatprep.subr.bf16.mxu0 0
      %275 = vmatpush1.bf16.msra.mxu0 0
      %276 = vmatprep.subr.bf16.mxu0 0
      %277 = vmatpush1.bf16.msra.mxu0 0
      %278 = vmatprep.subr.bf16.mxu0 %v264
      %279 = vmatpush1.bf16.msra.mxu0 %v261
      %280 = vmatprep.subr.bf16.mxu0 %v250
      %281 = vmatpush1.bf16.msra.mxu0 %v249
      %282 = vmatprep.subr.bf16.mxu0 0
      %283 = vmatpush2.bf16.msra.mxu0 0
      %284 = vmatprep.subr.bf16.mxu0 0
      %285 = vmatpush2.bf16.msra.mxu0 0
      %286 = vmatprep.subr.bf16.mxu0 0
      %287 = vmatpush2.bf16.msra.mxu0 0
      %288 = vmatprep.subr.bf16.mxu0 0
      %289 = vmatpush2.bf16.msra.mxu0 0
      %290 = vmatprep.subr.bf16.mxu0 0
      %291 = vmatpush2.bf16.msra.mxu0 0
      %292 = vmatprep.subr.bf16.mxu0 0
      %293 = vmatpush2.bf16.msra.mxu0 0
      %294 = vmatprep.subr.bf16.mxu0 0
      %295 = vmatpush2.bf16.msra.mxu0 0
      %296 = vmatprep.subr.bf16.mxu0 0
      %297 = vmatpush2.bf16.msra.mxu0 0
      %298 = vmatprep.mubr.bf16.mxu0 0
      %299 = vmatmul.mubr.bf16.gmra.mxu0 %v257
      %v300 = vpop.f32.mrf.mxu0
      %v301 = vadd.f32 %v233, %v300
      %v302 = vpop.f32.mrf.mxu0
      %v303 = vadd.f32 %v237, %v302
      %v304 = vpop.f32.mrf.mxu0
      %v305 = vpop.f32.mrf.mxu0
      %306 = vdwg.mxu0
      %v307 = vmax.f32 %v301, 0.0
      %v308 = vmax.f32 %v303, 0.0
      %v309 = vpack.c.bf16 %v307, %v307
      %v310 = vpack.c.bf16 %v308, %v308
      %v311 = vld [vmem:[%s3] sm:$0xf]
      %v312 = vld [vmem:[%s3 + $0x4] sm:$0xf]
      %v313 = vld [vmem:[%s3 + $0x8] sm:$0xf]
      %v314 = vld [vmem:[%s3 + $0xc] sm:$0xf]
      %v315 = vld [vmem:[%s3 + $0x10] sm:$0xf]
      %v316 = vld [vmem:[%s3 + $0x14] sm:$0xf]
      %v317 = vld [vmem:[%s3 + $0x18] sm:$0xf]
      %v318 = vld [vmem:[%s3 + $0x1c] sm:$0xf]
      %v319 = vld [vmem:[%s3 + $0x20] sm:$0xf]
      %v320 = vld [vmem:[%s3 + $0x24] sm:$0xf]
      %v321 = vld [vmem:[%s3 + $0x28] sm:$0xf]
      %v322 = vld [vmem:[%s3 + $0x2c] sm:$0xf]
      %v323 = vld [vmem:[%s3 + $0x30] sm:$0xf]
      %v324 = vld [vmem:[%s3 + $0x34] sm:$0xf]
      %v325 = vld [vmem:[%s3 + $0x38] sm:$0xf]
      %v326 = vld [vmem:[%s3 + $0x3c] sm:$0xf]
      %v327 = vld [vmem:[%s3 + $0x40] sm:$0xf]
      %v328 = vld [vmem:[%s3 + $0x44] sm:$0xf]
      %v329 = vld [vmem:[%s3 + $0x48] sm:$0xf]
      %v330 = vld [vmem:[%s3 + $0x4c] sm:$0xf]
      %v331 = vld [vmem:[%s3 + $0x50] sm:$0xf]
      %v332 = vld [vmem:[%s3 + $0x54] sm:$0xf]
      %v333 = vld [vmem:[%s3 + $0x58] sm:$0xf]
      %v334 = vld [vmem:[%s3 + $0x5c] sm:$0xf]
      %v335 = vld [vmem:[%s3 + $0x60] sm:$0xf]
      %v336 = vld [vmem:[%s3 + $0x64] sm:$0xf]
      %v337 = vld [vmem:[%s3 + $0x68] sm:$0xf]
      %v338 = vld [vmem:[%s3 + $0x6c] sm:$0xf]
      %v339 = vld [vmem:[%s3 + $0x70] sm:$0xf]
      %v340 = vld [vmem:[%s3 + $0x74] sm:$0xf]
      %v341 = vld [vmem:[%s3 + $0x78] sm:$0xf]
      %v342 = vld [vmem:[%s3 + $0x7c] sm:$0xf]
      %v343 = vld [vmem:[#allocation2] sm:$0x1]
      %v345 = vlaneseq
      %v346 = vshrl.u32 %v345, 7
      %v347 = vsub.s32 0, %v346
      %v348 = vrot.slane %v343, %v347
      %v382 = vunpack.c.l.b16 %v311
      %v383 = vunpack.c.l.b16 %v312
      %v384 = vunpack.c.l.b16 %v313
      %v385 = vunpack.c.l.b16 %v314
      %v386 = vunpack.c.l.b16 %v315
      %v387 = vunpack.c.l.b16 %v316
      %v388 = vunpack.c.l.b16 %v317
      %v389 = vunpack.c.l.b16 %v318
      %v390 = vunpack.c.l.b16 %v319
      %v391 = vunpack.c.l.b16 %v320
      %v392 = vunpack.c.l.b16 %v321
      %v393 = vunpack.c.l.b16 %v322
      %v394 = vunpack.c.l.b16 %v323
      %v395 = vunpack.c.l.b16 %v324
      %v396 = vunpack.c.l.b16 %v325
      %v397 = vunpack.c.l.b16 %v326
      %v398 = vunpack.c.l.b16 %v327
      %v399 = vunpack.c.l.b16 %v328
      %v400 = vunpack.c.l.b16 %v329
      %v401 = vunpack.c.l.b16 %v330
      %v402 = vunpack.c.l.b16 %v331
      %v403 = vunpack.c.l.b16 %v332
      %v404 = vunpack.c.l.b16 %v333
      %v405 = vunpack.c.l.b16 %v334
      %v406 = vunpack.c.l.b16 %v335
      %v407 = vunpack.c.l.b16 %v336
      %v408 = vunpack.c.l.b16 %v337
      %v409 = vunpack.c.l.b16 %v338
      %v410 = vunpack.c.l.b16 %v339
      %v411 = vunpack.c.l.b16 %v340
      %v412 = vunpack.c.l.b16 %v341
      %v413 = vunpack.c.l.b16 %v342
      %v414 = vpack.c.b16 %v383, %v382
      %v415 = vpack.c.b16 %v385, %v384
      %v416 = vpack.c.b16 %v387, %v386
      %v417 = vpack.c.b16 %v389, %v388
      %v418 = vpack.c.b16 %v391, %v390
      %v419 = vpack.c.b16 %v393, %v392
      %v420 = vpack.c.b16 %v395, %v394
      %v421 = vpack.c.b16 %v397, %v396
      %v422 = vpack.c.b16 %v399, %v398
      %v423 = vpack.c.b16 %v401, %v400
      %v424 = vpack.c.b16 %v403, %v402
      %v425 = vpack.c.b16 %v405, %v404
      %v426 = vpack.c.b16 %v407, %v406
      %v427 = vpack.c.b16 %v409, %v408
      %v428 = vpack.c.b16 %v411, %v410
      %v429 = vpack.c.b16 %v413, %v412
      %446 = vmatprep.subr.bf16.mxu0 0
      %447 = vmatpush1.bf16.msra.mxu0 %v421
      %448 = vmatprep.subr.bf16.mxu0 0
      %449 = vmatpush1.bf16.msra.mxu0 %v420
      %450 = vmatprep.subr.bf16.mxu0 0
      %451 = vmatpush1.bf16.msra.mxu0 %v419
      %452 = vmatprep.subr.bf16.mxu0 0
      %453 = vmatpush1.bf16.msra.mxu0 %v418
      %454 = vmatprep.subr.bf16.mxu0 0
      %455 = vmatpush1.bf16.msra.mxu0 %v417
      %456 = vmatprep.subr.bf16.mxu0 0
      %457 = vmatpush1.bf16.msra.mxu0 %v416
      %458 = vmatprep.subr.bf16.mxu0 0
      %459 = vmatpush1.bf16.msra.mxu0 %v415
      %460 = vmatprep.subr.bf16.mxu0 0
      %461 = vmatpush1.bf16.msra.mxu0 %v414
      %462 = vmatprep.subr.bf16.mxu0 0
      %463 = vmatpush2.bf16.msra.mxu0 %v429
      %464 = vmatprep.subr.bf16.mxu0 0
      %465 = vmatpush2.bf16.msra.mxu0 %v428
      %466 = vmatprep.subr.bf16.mxu0 0
      %467 = vmatpush2.bf16.msra.mxu0 %v427
      %468 = vmatprep.subr.bf16.mxu0 0
      %469 = vmatpush2.bf16.msra.mxu0 %v426
      %470 = vmatprep.subr.bf16.mxu0 0
      %471 = vmatpush2.bf16.msra.mxu0 %v425
      %472 = vmatprep.subr.bf16.mxu0 0
      %473 = vmatpush2.bf16.msra.mxu0 %v424
      %474 = vmatprep.subr.bf16.mxu0 0
      %475 = vmatpush2.bf16.msra.mxu0 %v423
      %476 = vmatprep.subr.bf16.mxu0 0
      %477 = vmatpush2.bf16.msra.mxu0 %v422
      %478 = vmatprep.mubr.bf16.mxu0 %v310
      %479 = vmatmul.mubr.bf16.gmra.mxu0 %v309
      %v480 = vpop.f32.mrf.mxu0
      %v481 = vadd.f32 %v348, %v480
      %v482 = vpop.f32.mrf.mxu0
      %v483 = vpop.f32.mrf.mxu0
      %v484 = vpop.f32.mrf.mxu0
      %485 = vdwg.mxu0
      %vm486 = vcmask 7168
      %487 = vst.msk [vmem:[%s221] sm:$0xff] %vm486, %v481
      %p488 = scmp.lt.s32.totalorder %s18, 1
      %s489 = scalar_select %p488, %s18, 1
      %s490 = smul.addr %s489, 8
      %s491 = scalar_lea.vmem %s5, %s490
      // Predicated region
      $region41: #{_value_forward_padded.1} parent=39 // pred_check
        %p492 = pneg %p146
      $region42: #{_value_forward_padded.1} parent=39 // pred_check_branch
        %494 = sbr.rel (%p492) target = $region44
      $region43: #{_value_forward_padded.1} parent=39 // pred_region
        _
      $region44: #{_value_forward_padded.1} parent=39 // pred_fallthru
        _
    $region40: #{_value_forward_padded.1} parent=5 // pred_fallthru
      _
    %p495 = scmp.le.s32.totalorder 2, %s13
    // Predicated region
    $region45: #{_value_forward_padded.1} parent=5 // pred_check
      %p496 = pneg %p495
    $region46: #{_value_forward_padded.1} parent=5 // pred_check_branch
      %498 = sbr.rel (%p496) target = $region48
    $region47: #{_value_forward_padded.1} parent=5 // pred_region
      %s499 = ssub.s32 %s13, 2
      // Predicated region
      $region49: #{_value_forward_padded.1} parent=47 // pred_check
        %p500 = pneg %p152
      $region50: #{_value_forward_padded.1} parent=47 // pred_check_branch
        %502 = sbr.rel (%p500) target = $region52
      $region51: #{_value_forward_padded.1} parent=47 // pred_region
        %p503 = scmp.lt.s32.totalorder %s19, 1
        %s504 = scalar_select %p503, %s19, 1
        %s505 = smul.addr %s504, 8
        %s506 = scalar_lea.vmem %s5, %s505
      $region52: #{_value_forward_padded.1} parent=47 // pred_fallthru
        _
    $region48: #{_value_forward_padded.1} parent=5 // pred_fallthru
      _
  $region6: #{_value_forward_padded.1} parent=0 // loop_footer
    %s17 = sadd.s32 1, %s13
  $region7: #{_value_forward_padded.1} parent=0 // loop_footer_branch
    %12 = sbr.rel target = $region3
  $region8: #{_value_forward_padded.1} parent=0 // loop_exit
    _

</llo_original>
